<compile_context>
chip_gen: v6e
topology: v6e:2x2x1
jax: 0.10.0
libtpu: 0.0.40
codegen_flags: <defaults>
</compile_context>

<pallas_src>
import functools

import jax
import jax.numpy as jnp
from jax.experimental import pallas as pl
from jax.experimental.pallas import tpu as pltpu


def _round_up(x, m):
    return ((x + m - 1) // m) * m


# ----------------------------------------------------------------------------
# Fused kernel: normalization + conv1 + ReLU + conv2, all in VMEM.
# ----------------------------------------------------------------------------
def _gcn_fused_kernel(a_ref, x_ref, w1t_ref, b1_ref, w2t_ref, b2_ref, o_ref):
    a = a_ref[...]                                   # (N, N) f32 adjacency
    x = x_ref[...]                                   # (N, F_in)

    # deg = A_hat.sum(0) = A.sum(0) + 1  (identity folded in analytically).
    deg = jnp.sum(a, axis=0, keepdims=True) + 1.0    # (1, N)
    dinv_r = jax.lax.rsqrt(deg)                      # (1, N)  D_hat^{-1/2}
    dinv = jnp.transpose(dinv_r)                     # (N, 1)

    # s = D^-1/2 A_hat D^-1/2 @ 1  -> what the broadcast bias picks up.
    # A @ dinv runs on the (idle) MXU instead of a full N x N VPU multiply.
    s = dinv * (jnp.dot(a, dinv, preferred_element_type=jnp.float32) + dinv)

    # ---- layer 1: aggregate X first (F_in = narrow side), then W1 ----
    xs = x * dinv                                                        # (N, F_in)
    agg_x = dinv * (jnp.dot(a, xs, preferred_element_type=jnp.float32) + xs)
    h1 = jnp.dot(agg_x, w1t_ref[...], preferred_element_type=jnp.float32)
    h1 = jnp.maximum(h1 + s * b1_ref[...], 0.0)                          # (N, H), ReLU

    # ---- layer 2: aggregate relu(H1), then padded W2 (lane-dense out) ----
    hs = h1 * dinv
    agg_h = dinv * (jnp.dot(a, hs, preferred_element_type=jnp.float32) + hs)
    out = jnp.dot(agg_h, w2t_ref[...], preferred_element_type=jnp.float32)
    o_ref[...] = (out + s * b2_ref[...]).astype(o_ref.dtype)             # (N, pad_out)


# ----------------------------------------------------------------------------
# One-time parameter glue (hoisted out of the per-call hot path).
# ----------------------------------------------------------------------------
def prepare_params(w1, b1, w2, b2):
    hidden, _ = w1.shape
    out_size = w2.shape[0]
    pad_out = _round_up(max(out_size, 128), 128)     # lane-dense output width

    w1t = jnp.asarray(w1).T                                              # (F_in, H)
    b1_2d = jnp.asarray(b1).reshape(1, hidden)
    w2t = jnp.zeros((hidden, pad_out), w2.dtype).at[:, :out_size].set(
        jnp.asarray(w2).T)
    b2_2d = jnp.zeros((1, pad_out), b2.dtype).at[:, :out_size].set(
        jnp.asarray(b2).reshape(1, out_size))
    return w1t, b1_2d, w2t, b2_2d, out_size


def _vmem_limit_bytes():
    # v5e/v6e: 128 MiB physical; v7x: 64 MiB. Leave headroom for compiler
    # scratch and stay <= 48 MiB on 64 MiB parts.
    try:
        cap = pltpu.get_tpu_info().vmem_capacity_bytes
    except Exception:
        cap = 64 * 1024 * 1024
    return min(cap // 2, 48 * 1024 * 1024)


# ----------------------------------------------------------------------------
# Full GCN forward (conv1 -> relu -> conv2), matching GCN_dgl.forward.
# Params must come from prepare_params() (transpose/pad done once, not per call).
# ----------------------------------------------------------------------------
@functools.partial(jax.jit, static_argnames=("out_size",))
def gcn_forward(a, x, w1t, b1_2d, w2t, b2_2d, *, out_size):
    n, f_in = x.shape
    hidden, pad_out = w2t.shape

    flops = (2 * n * n * (f_in + hidden + 1)
             + 2 * n * (f_in * hidden + hidden * pad_out)
             + 8 * n * (f_in + hidden) + 6 * n * n)
    bytes_accessed = 4 * (n * n + n * f_in + f_in * hidden + hidden
                          + hidden * pad_out + pad_out + n * pad_out)
    cost = pl.CostEstimate(flops=flops, transcendentals=n,
                           bytes_accessed=bytes_accessed)

    out_padded = pl.pallas_call(
        _gcn_fused_kernel,
        out_shape=jax.ShapeDtypeStruct((n, pad_out), x.dtype),
        in_specs=[
            pl.BlockSpec((n, n), lambda: (0, 0)),
            pl.BlockSpec((n, f_in), lambda: (0, 0)),
            pl.BlockSpec((f_in, hidden), lambda: (0, 0)),
            pl.BlockSpec((1, hidden), lambda: (0, 0)),
            pl.BlockSpec((hidden, pad_out), lambda: (0, 0)),
            pl.BlockSpec((1, pad_out), lambda: (0, 0)),
        ],
        out_specs=pl.BlockSpec((n, pad_out), lambda: (0, 0)),
        compiler_params=pltpu.CompilerParams(vmem_limit_bytes=_vmem_limit_bytes()),
        cost_estimate=cost,
    )(a, x, w1t, b1_2d, w2t, b2_2d)

    # Consumers that accept the lane-padded (N, 128) slab can drop this slice.
    return out_padded[:, :out_size]


def _reference(a, x, w1, b1, w2, b2):
    n = a.shape[0]
    a_hat = a + jnp.eye(n, dtype=a.dtype)
    d = jnp.sum(a_hat, axis=0)
    dinv = d ** -0.5
    a_norm = dinv[:, None] * a_hat * dinv[None, :]
    h = a_norm @ (x @ w1.T + b1)
    h = jnp.maximum(h, 0.0)
    return a_norm @ (h @ w2.T + b2)


if __name__ == "__main__":
    key = jax.random.PRNGKey(0)
    k_a, k_x, k_w1, k_b1, k_w2, k_b2 = jax.random.split(key, 6)

    N = 128           # number of nodes
    in_size = 32      # input feature size
    hidden_size = 64  # hidden size
    out_size = 8      # number of classes

    # Symmetric 0/1 adjacency (no self loops; the kernel folds in +I).
    # TODO(synk): the original loads the Cora graph via DGL; a deterministic
    # random dense adjacency stands in for it here.
    upper = (jax.random.uniform(k_a, (N, N)) < 0.05).astype(jnp.float32)
    upper = jnp.triu(upper, k=1)
    A = upper + upper.T

    X = jax.random.normal(k_x, (N, in_size), dtype=jnp.float32)

    # nn.Linear-style deterministic init: U(-1/sqrt(fan_in), 1/sqrt(fan_in)).
    lim1 = 1.0 / (in_size ** 0.5)
    W1 = jax.random.uniform(k_w1, (hidden_size, in_size), minval=-lim1, maxval=lim1)
    b1 = jax.random.uniform(k_b1, (hidden_size,), minval=-lim1, maxval=lim1)
    lim2 = 1.0 / (hidden_size ** 0.5)
    W2 = jax.random.uniform(k_w2, (out_size, hidden_size), minval=-lim2, maxval=lim2)
    b2 = jax.random.uniform(k_b2, (out_size,), minval=-lim2, maxval=lim2)

    # Parameter glue (transpose / zero-pad) done once, outside the hot path.
    w1t, b1_2d, w2t, b2_2d, out_sz = prepare_params(W1, b1, W2, b2)
    w1t, b1_2d, w2t, b2_2d = map(jax.block_until_ready, (w1t, b1_2d, w2t, b2_2d))

    out = jax.block_until_ready(
        gcn_forward(A, X, w1t, b1_2d, w2t, b2_2d, out_size=out_sz))

    ref = _reference(A, X, W1, b1, W2, b2)
    assert out.shape == (N, out_size)
    assert jnp.allclose(out, ref, rtol=1e-4, atol=1e-4), "mismatch vs reference"

    print("KERNEL_OK")
</pallas_src>

<mosaic_0001>
module attributes {stable_mosaic.version = 11 : i64} {
  func.func @_gcn_fused_kernel(%arg0: memref<128x128xf32, #tpu.memory_space<vmem>>, %arg1: memref<128x32xf32, #tpu.memory_space<vmem>>, %arg2: memref<32x64xf32, #tpu.memory_space<vmem>>, %arg3: memref<1x64xf32, #tpu.memory_space<vmem>>, %arg4: memref<64x128xf32, #tpu.memory_space<vmem>>, %arg5: memref<1x128xf32, #tpu.memory_space<vmem>>, %arg6: memref<128x128xf32, #tpu.memory_space<vmem>>) attributes {dimension_semantics = [], scalar_prefetch = 0 : i64, scratch_operands = 0 : i64, tpu.core_type = #tpu.core_type<tc>} {
    %c0 = arith.constant 0 : index
    %c0_0 = arith.constant 0 : index
    %0 = vector.load %arg0[%c0, %c0_0] : memref<128x128xf32, #tpu.memory_space<vmem>>, vector<128x128xf32>
    %c0_1 = arith.constant 0 : index
    %c0_2 = arith.constant 0 : index
    %1 = vector.load %arg1[%c0_1, %c0_2] : memref<128x32xf32, #tpu.memory_space<vmem>>, vector<128x32xf32>
    %cst = arith.constant dense<0.000000e+00> : vector<128xf32>
    %2 = vector.multi_reduction <add>, %0, %cst [0] : vector<128x128xf32> to vector<128xf32>
    %3 = vector.shape_cast %2 : vector<128xf32> to vector<1x128xf32>
    %cst_3 = arith.constant 1.000000e+00 : f32
    %4 = vector.broadcast %cst_3 : f32 to vector<1x128xf32>
    %5 = arith.addf %3, %4 : vector<1x128xf32>
    %6 = math.rsqrt %5 : vector<1x128xf32>
    %7 = tpu.transpose %6, [1, 0] : vector<1x128xf32> -> vector<128x1xf32>
    %cst_4 = arith.constant dense<0.000000e+00> : vector<128x1xf32>
    %8 = tpu.matmul %0, %7, %cst_4 {dimension_numbers = #tpu.dot_dimension_numbers<[1], [0], [0], [1], [0, 0, 1, 1], [], []>} : vector<128x128xf32>, vector<128x1xf32>, vector<128x1xf32> -> vector<128x1xf32>
    %9 = arith.addf %8, %7 : vector<128x1xf32>
    %10 = arith.mulf %7, %9 : vector<128x1xf32>
    %11 = vector.broadcast %7 : vector<128x1xf32> to vector<128x32xf32>
    %12 = arith.mulf %1, %11 : vector<128x32xf32>
    %cst_5 = arith.constant dense<0.000000e+00> : vector<128x32xf32>
    %13 = tpu.matmul %0, %12, %cst_5 {dimension_numbers = #tpu.dot_dimension_numbers<[1], [0], [0], [1], [0, 0, 1, 1], [], []>} : vector<128x128xf32>, vector<128x32xf32>, vector<128x32xf32> -> vector<128x32xf32>
    %14 = arith.addf %13, %12 : vector<128x32xf32>
    %15 = vector.broadcast %7 : vector<128x1xf32> to vector<128x32xf32>
    %16 = arith.mulf %15, %14 : vector<128x32xf32>
    %c0_6 = arith.constant 0 : index
    %c0_7 = arith.constant 0 : index
    %17 = vector.load %arg2[%c0_6, %c0_7] : memref<32x64xf32, #tpu.memory_space<vmem>>, vector<32x64xf32>
    %cst_8 = arith.constant dense<0.000000e+00> : vector<128x64xf32>
    %18 = tpu.matmul %16, %17, %cst_8 {dimension_numbers = #tpu.dot_dimension_numbers<[1], [0], [0], [1], [0, 0, 1, 1], [], []>} : vector<128x32xf32>, vector<32x64xf32>, vector<128x64xf32> -> vector<128x64xf32>
    %c0_9 = arith.constant 0 : index
    %c0_10 = arith.constant 0 : index
    %19 = vector.load %arg3[%c0_9, %c0_10] : memref<1x64xf32, #tpu.memory_space<vmem>>, vector<1x64xf32>
    %20 = vector.broadcast %10 : vector<128x1xf32> to vector<128x64xf32>
    %21 = vector.broadcast %19 : vector<1x64xf32> to vector<128x64xf32>
    %22 = arith.mulf %20, %21 : vector<128x64xf32>
    %23 = arith.addf %18, %22 : vector<128x64xf32>
    %cst_11 = arith.constant 0.000000e+00 : f32
    %24 = vector.broadcast %cst_11 : f32 to vector<128x64xf32>
    %25 = arith.maximumf %23, %24 : vector<128x64xf32>
    %26 = vector.broadcast %7 : vector<128x1xf32> to vector<128x64xf32>
    %27 = arith.mulf %25, %26 : vector<128x64xf32>
    %cst_12 = arith.constant dense<0.000000e+00> : vector<128x64xf32>
    %28 = tpu.matmul %0, %27, %cst_12 {dimension_numbers = #tpu.dot_dimension_numbers<[1], [0], [0], [1], [0, 0, 1, 1], [], []>} : vector<128x128xf32>, vector<128x64xf32>, vector<128x64xf32> -> vector<128x64xf32>
    %29 = arith.addf %28, %27 : vector<128x64xf32>
    %30 = vector.broadcast %7 : vector<128x1xf32> to vector<128x64xf32>
    %31 = arith.mulf %30, %29 : vector<128x64xf32>
    %c0_13 = arith.constant 0 : index
    %c0_14 = arith.constant 0 : index
    %32 = vector.load %arg4[%c0_13, %c0_14] : memref<64x128xf32, #tpu.memory_space<vmem>>, vector<64x128xf32>
    %cst_15 = arith.constant dense<0.000000e+00> : vector<128x128xf32>
    %33 = tpu.matmul %31, %32, %cst_15 {dimension_numbers = #tpu.dot_dimension_numbers<[1], [0], [0], [1], [0, 0, 1, 1], [], []>} : vector<128x64xf32>, vector<64x128xf32>, vector<128x128xf32> -> vector<128x128xf32>
    %c0_16 = arith.constant 0 : index
    %c0_17 = arith.constant 0 : index
    %34 = vector.load %arg5[%c0_16, %c0_17] : memref<1x128xf32, #tpu.memory_space<vmem>>, vector<1x128xf32>
    %35 = vector.broadcast %10 : vector<128x1xf32> to vector<128x128xf32>
    %36 = vector.broadcast %34 : vector<1x128xf32> to vector<128x128xf32>
    %37 = arith.mulf %35, %36 : vector<128x128xf32>
    %38 = arith.addf %33, %37 : vector<128x128xf32>
    %c0_18 = arith.constant 0 : index
    %c0_19 = arith.constant 0 : index
    %39 = vector.load %arg6[%c0_18, %c0_19] : memref<128x128xf32, #tpu.memory_space<vmem>>, vector<128x128xf32>
    tpu.vector_store %arg6[%c0_18, %c0_19], %38 {strides = array<i32>} : memref<128x128xf32, #tpu.memory_space<vmem>>, vector<128x128xf32>,
    return
  }
}

</mosaic_0001>

<llo_original>
// kernel: gcn_forward.1
$region0: #{gcn_forward.1}
  #allocation0 [shape = 'u32[]', space=smem, size = 0x4, offset = 0x4, fixed_abs, tag = 'smem constant byte address 0x4 - core index']
  #allocation1 [shape = 'u32[144,128]{1,0:T(1,128)}', space=vmem, size = 0x12000, scoped, tag = 'internal scratch']
  %s0 = inlined_call_operand.vmem [shape: f32[128,128], index: 0, kind: input, shape index: {}]
  %s1 = inlined_call_operand.vmem [shape: f32[128,32], index: 1, kind: input, shape index: {}]
  %s2 = inlined_call_operand.vmem [shape: f32[32,64], index: 2, kind: input, shape index: {}]
  %s3 = inlined_call_operand.vmem [shape: f32[1,64], index: 3, kind: input, shape index: {}]
  %s4 = inlined_call_operand.hbm [shape: f32[64,128], index: 4, kind: input, shape index: {}]
  %s5 = inlined_call_operand.vmem [shape: f32[1,128], index: 5, kind: input, shape index: {}]
  %s6 = inlined_call_operand.vmem [shape: f32[128,128], index: 6, kind: output, shape index: {}]
  %s7 = sld [smem:[#allocation0]]
  $region38: #{gcn_forward.1} parent=0
    _
  %s9 = ssub.s32 1, %s7
  %s10 = scalar_select 0, %s9, %s7
  $region1: #{gcn_forward.1} parent=0
    #allocation2 [shape = 'u8[32768]{0}', space=vmem, size = 0x8000, scoped, tag = 'input window, operand 4, single buffered']
    #allocation3 [shape = 's32[1]{0}', space=sflag, size = 0x4, scoped, tag = 'scoped memory for gcn_forward.1']
    %11 = vsyncpa [#allocation3], 0
    // Predicated region
    $region2: #{gcn_forward.1} parent=1 // pred_check
      _
    $region3: #{gcn_forward.1} parent=1 // pred_check_branch
      %13 = sbr.rel (0) target = $region5
    $region4: #{gcn_forward.1} parent=1 // pred_region
      _
    $region5: #{gcn_forward.1} parent=1 // pred_fallthru
      _
    // Predicated region
    $region6: #{gcn_forward.1} parent=1 // pred_check
      _
    $region7: #{gcn_forward.1} parent=1 // pred_check_branch
      %15 = sbr.rel (0) target = $region9
    $region8: #{gcn_forward.1} parent=1 // pred_region
      _
    $region9: #{gcn_forward.1} parent=1 // pred_fallthru
      _
    // Predicated region
    $region10: #{gcn_forward.1} parent=1 // pred_check
      _
    $region11: #{gcn_forward.1} parent=1 // pred_check_branch
      %17 = sbr.rel (0) target = $region13
    $region12: #{gcn_forward.1} parent=1 // pred_region
      _
    $region13: #{gcn_forward.1} parent=1 // pred_fallthru
      _
    // Predicated region
    $region14: #{gcn_forward.1} parent=1 // pred_check
      _
    $region15: #{gcn_forward.1} parent=1 // pred_check_branch
      %19 = sbr.rel (0) target = $region17
    $region16: #{gcn_forward.1} parent=1 // pred_region
      _
    $region17: #{gcn_forward.1} parent=1 // pred_fallthru
      _
    // Predicated region
    $region18: #{gcn_forward.1} parent=1 // pred_check
      _
    $region19: #{gcn_forward.1} parent=1 // pred_check_branch
      %21 = sbr.rel (0) target = $region21
    $region20: #{gcn_forward.1} parent=1 // pred_region
      %s23 = ssub.s32 1024, 1024
      %24 = vsyncadd [#allocation3], %s23
      %s25 = sshll.u32 [#allocation2], 4
      %s26 = int_to_ptr.vmem [resolvable:$true] %s25
      %31 = dma.hbm_to_vmem [thread:$0]  %s4, 1024, %s26, [#allocation3], 128, 128, 8
    $region21: #{gcn_forward.1} parent=1 // pred_fallthru
      _
    // Predicated region
    $region22: #{gcn_forward.1} parent=1 // pred_check
      _
    $region23: #{gcn_forward.1} parent=1 // pred_check_branch
      %33 = sbr.rel (0) target = $region25
    $region24: #{gcn_forward.1} parent=1 // pred_region
      _
    $region25: #{gcn_forward.1} parent=1 // pred_fallthru
      _
    // Predicated region
    $region26: #{gcn_forward.1} parent=1 // pred_check
      _
    $region27: #{gcn_forward.1} parent=1 // pred_check_branch
      %35 = sbr.rel (0) target = $region29
    $region28: #{gcn_forward.1} parent=1 // pred_region
      %36 = dma.done [#allocation3], 1024
    $region29: #{gcn_forward.1} parent=1 // pred_fallthru
      _
    %v37 = vld [vmem:[%s0] sm:$0xff]
    %v38 = vld [vmem:[%s0 + $0x8] sm:$0xff]
    %v39 = vld [vmem:[%s0 + $0x10] sm:$0xff]
    %v40 = vld [vmem:[%s0 + $0x18] sm:$0xff]
    %v41 = vld [vmem:[%s0 + $0x20] sm:$0xff]
    %v42 = vld [vmem:[%s0 + $0x28] sm:$0xff]
    %v43 = vld [vmem:[%s0 + $0x30] sm:$0xff]
    %v44 = vld [vmem:[%s0 + $0x38] sm:$0xff]
    %v45 = vld [vmem:[%s0 + $0x40] sm:$0xff]
    %v46 = vld [vmem:[%s0 + $0x48] sm:$0xff]
    %v47 = vld [vmem:[%s0 + $0x50] sm:$0xff]
    %v48 = vld [vmem:[%s0 + $0x58] sm:$0xff]
    %v49 = vld [vmem:[%s0 + $0x60] sm:$0xff]
    %v50 = vld [vmem:[%s0 + $0x68] sm:$0xff]
    %v51 = vld [vmem:[%s0 + $0x70] sm:$0xff]
    %v52 = vld [vmem:[%s0 + $0x78] sm:$0xff]
    %v53 = vld [vmem:[%s1] sm:$0xff]
    %v54 = vld [vmem:[%s1 + $0x8] sm:$0xff]
    %v55 = vld [vmem:[%s1 + $0x10] sm:$0xff]
    %v56 = vld [vmem:[%s1 + $0x18] sm:$0xff]
    %v57 = vld [vmem:[%s1 + $0x20] sm:$0xff]
    %v58 = vld [vmem:[%s1 + $0x28] sm:$0xff]
    %v59 = vld [vmem:[%s1 + $0x30] sm:$0xff]
    %v60 = vld [vmem:[%s1 + $0x38] sm:$0xff]
    %v61 = vld [vmem:[%s1 + $0x40] sm:$0xff]
    %v62 = vld [vmem:[%s1 + $0x48] sm:$0xff]
    %v63 = vld [vmem:[%s1 + $0x50] sm:$0xff]
    %v64 = vld [vmem:[%s1 + $0x58] sm:$0xff]
    %v65 = vld [vmem:[%s1 + $0x60] sm:$0xff]
    %v66 = vld [vmem:[%s1 + $0x68] sm:$0xff]
    %v67 = vld [vmem:[%s1 + $0x70] sm:$0xff]
    %v68 = vld [vmem:[%s1 + $0x78] sm:$0xff]
    %v69 = vadd.f32 %v37, %v38
    %v70 = vadd.f32 %v69, %v39
    %v71 = vadd.f32 %v70, %v40
    %v72 = vadd.f32 %v71, %v41
    %v73 = vadd.f32 %v72, %v42
    %v74 = vadd.f32 %v73, %v43
    %v75 = vadd.f32 %v74, %v44
    %v76 = vadd.f32 %v75, %v45
    %v77 = vadd.f32 %v76, %v46
    %v78 = vadd.f32 %v77, %v47
    %v79 = vadd.f32 %v78, %v48
    %v80 = vadd.f32 %v79, %v49
    %v81 = vadd.f32 %v80, %v50
    %v82 = vadd.f32 %v81, %v51
    %v83 = vadd.f32 %v82, %v52
    %v84 = vrot.slane %v83, 4
    %v85 = vadd.f32 %v83, %v84
    %v86 = vrot.slane %v85, 2
    %v87 = vadd.f32 %v85, %v86
    %v88 = vrot.slane %v87, 1
    %v89 = vadd.f32 %v87, %v88
    %v90 = vadd.f32 %v89, 1.0
    %v91 = vrsqrt.pop %v90
    %92 = vxpose.xlu0.b32.start [1/16] %v91, 128
    %93 = vxpose.xlu0.b32.cont [2/16] 0.0, 128
    %94 = vxpose.xlu0.b32.cont [3/16] 0.0, 128
    %95 = vxpose.xlu0.b32.cont [4/16] 0.0, 128
    %96 = vxpose.xlu0.b32.cont [5/16] 0.0, 128
    %97 = vxpose.xlu0.b32.cont [6/16] 0.0, 128
    %98 = vxpose.xlu0.b32.cont [7/16] 0.0, 128
    %99 = vxpose.xlu0.b32.cont [8/16] 0.0, 128
    %100 = vxpose.xlu0.b32.cont [9/16] 0.0, 128
    %101 = vxpose.xlu0.b32.cont [10/16] 0.0, 128
    %102 = vxpose.xlu0.b32.cont [11/16] 0.0, 128
    %103 = vxpose.xlu0.b32.cont [12/16] 0.0, 128
    %104 = vxpose.xlu0.b32.cont [13/16] 0.0, 128
    %105 = vxpose.xlu0.b32.cont [14/16] 0.0, 128
    %106 = vxpose.xlu0.b32.cont [15/16] 0.0, 128
    %107 = vxpose.xlu0.b32.end [16/16] 0.0, 128
    %v108 = vpop.trf.xlu0
    %v109 = vpop.trf.xlu0
    %v110 = vpop.trf.xlu0
    %v111 = vpop.trf.xlu0
    %v112 = vpop.trf.xlu0
    %v113 = vpop.trf.xlu0
    %v114 = vpop.trf.xlu0
    %v115 = vpop.trf.xlu0
    %v116 = vpop.trf.xlu0
    %v117 = vpop.trf.xlu0
    %v118 = vpop.trf.xlu0
    %v119 = vpop.trf.xlu0
    %v120 = vpop.trf.xlu0
    %v121 = vpop.trf.xlu0
    %v122 = vpop.trf.xlu0
    %v123 = vpop.trf.xlu0
    %124 = vmatprep.subr.mxu0 0.0
    %125 = vmatpush1.msra.mxu0 %v123
    %126 = vmatprep.subr.mxu0 0.0
    %127 = vmatpush1.msra.mxu0 %v122
    %128 = vmatprep.subr.mxu0 0.0
    %129 = vmatpush1.msra.mxu0 %v121
    %130 = vmatprep.subr.mxu0 0.0
    %131 = vmatpush1.msra.mxu0 %v120
    %132 = vmatprep.subr.mxu0 0.0
    %133 = vmatpush1.msra.mxu0 %v119
    %134 = vmatprep.subr.mxu0 0.0
    %135 = vmatpush1.msra.mxu0 %v118
    %136 = vmatprep.subr.mxu0 0.0
    %137 = vmatpush1.msra.mxu0 %v117
    %138 = vmatprep.subr.mxu0 0.0
    %139 = vmatpush1.msra.mxu0 %v116
    %140 = vmatprep.subr.mxu0 0.0
    %141 = vmatpush1.msra.mxu0 %v115
    %142 = vmatprep.subr.mxu0 0.0
    %143 = vmatpush1.msra.mxu0 %v114
    %144 = vmatprep.subr.mxu0 0.0
    %145 = vmatpush1.msra.mxu0 %v113
    %146 = vmatprep.subr.mxu0 0.0
    %147 = vmatpush1.msra.mxu0 %v112
    %148 = vmatprep.subr.mxu0 0.0
    %149 = vmatpush1.msra.mxu0 %v111
    %150 = vmatprep.subr.mxu0 0.0
    %151 = vmatpush1.msra.mxu0 %v110
    %152 = vmatprep.subr.mxu0 0.0
    %153 = vmatpush1.msra.mxu0 %v109
    %154 = vmatprep.subr.mxu0 0.0
    %155 = vmatpush1.msra.mxu0 %v108
    %156 = vmatprep.subr.mxu0 0.0
    %157 = vmatpush2.msra.mxu0 0.0
    %158 = vmatprep.subr.mxu0 0.0
    %159 = vmatpush2.msra.mxu0 0.0
    %160 = vmatprep.subr.mxu0 0.0
    %161 = vmatpush2.msra.mxu0 0.0
    %162 = vmatprep.subr.mxu0 0.0
    %163 = vmatpush2.msra.mxu0 0.0
    %164 = vmatprep.subr.mxu0 0.0
    %165 = vmatpush2.msra.mxu0 0.0
    %166 = vmatprep.subr.mxu0 0.0
    %167 = vmatpush2.msra.mxu0 0.0
    %168 = vmatprep.subr.mxu0 0.0
    %169 = vmatpush2.msra.mxu0 0.0
    %170 = vmatprep.subr.mxu0 0.0
    %171 = vmatpush2.msra.mxu0 0.0
    %172 = vmatprep.subr.mxu0 0.0
    %173 = vmatpush2.msra.mxu0 0.0
    %174 = vmatprep.subr.mxu0 0.0
    %175 = vmatpush2.msra.mxu0 0.0
    %176 = vmatprep.subr.mxu0 0.0
    %177 = vmatpush2.msra.mxu0 0.0
    %178 = vmatprep.subr.mxu0 0.0
    %179 = vmatpush2.msra.mxu0 0.0
    %180 = vmatprep.subr.mxu0 0.0
    %181 = vmatpush2.msra.mxu0 0.0
    %182 = vmatprep.subr.mxu0 0.0
    %183 = vmatpush2.msra.mxu0 0.0
    %184 = vmatprep.subr.mxu0 0.0
    %185 = vmatpush2.msra.mxu0 0.0
    %186 = vmatprep.subr.mxu0 0.0
    %187 = vmatpush2.msra.mxu0 0.0
    %188 = vmatprep.mubr.f32.mxu0 0.0
    %189 = vmatmul.mubr.f32.gmra.mxu0 %v37
    %v190 = vpop.f32.mrf.mxu0
    %v191 = vadd.f32 %v108, %v190
    %v192 = vpop.f32.mrf.mxu0
    %193 = vmatprep.mubr.f32.mxu0 0.0
    %194 = vmatmul.mubr.f32.gmra.mxu0 %v38
    %v195 = vpop.f32.mrf.mxu0
    %v196 = vadd.f32 %v109, %v195
    %v197 = vpop.f32.mrf.mxu0
    %198 = vmatprep.mubr.f32.mxu0 0.0
    %199 = vmatmul.mubr.f32.gmra.mxu0 %v39
    %v200 = vpop.f32.mrf.mxu0
    %v201 = vadd.f32 %v110, %v200
    %v202 = vpop.f32.mrf.mxu0
    %203 = vmatprep.mubr.f32.mxu0 0.0
    %204 = vmatmul.mubr.f32.gmra.mxu0 %v40
    %v205 = vpop.f32.mrf.mxu0
    %v206 = vadd.f32 %v111, %v205
    %v207 = vpop.f32.mrf.mxu0
    %208 = vmatprep.mubr.f32.mxu0 0.0
    %209 = vmatmul.mubr.f32.gmra.mxu0 %v41
    %v210 = vpop.f32.mrf.mxu0
    %v211 = vadd.f32 %v112, %v210
    %v212 = vpop.f32.mrf.mxu0
    %213 = vmatprep.mubr.f32.mxu0 0.0
    %214 = vmatmul.mubr.f32.gmra.mxu0 %v42
    %v215 = vpop.f32.mrf.mxu0
    %v216 = vadd.f32 %v113, %v215
    %v217 = vpop.f32.mrf.mxu0
    %218 = vmatprep.mubr.f32.mxu0 0.0
    %219 = vmatmul.mubr.f32.gmra.mxu0 %v43
    %v220 = vpop.f32.mrf.mxu0
    %v221 = vadd.f32 %v114, %v220
    %v222 = vpop.f32.mrf.mxu0
    %223 = vmatprep.mubr.f32.mxu0 0.0
    %224 = vmatmul.mubr.f32.gmra.mxu0 %v44
    %v225 = vpop.f32.mrf.mxu0
    %v226 = vadd.f32 %v115, %v225
    %v227 = vpop.f32.mrf.mxu0
    %228 = vmatprep.mubr.f32.mxu0 0.0
    %229 = vmatmul.mubr.f32.gmra.mxu0 %v45
    %v230 = vpop.f32.mrf.mxu0
    %v231 = vadd.f32 %v116, %v230
    %v232 = vpop.f32.mrf.mxu0
    %233 = vmatprep.mubr.f32.mxu0 0.0
    %234 = vmatmul.mubr.f32.gmra.mxu0 %v46
    %v235 = vpop.f32.mrf.mxu0
    %v236 = vadd.f32 %v117, %v235
    %v237 = vpop.f32.mrf.mxu0
    %238 = vmatprep.mubr.f32.mxu0 0.0
    %239 = vmatmul.mubr.f32.gmra.mxu0 %v47
    %v240 = vpop.f32.mrf.mxu0
    %v241 = vadd.f32 %v118, %v240
    %v242 = vpop.f32.mrf.mxu0
    %243 = vmatprep.mubr.f32.mxu0 0.0
    %244 = vmatmul.mubr.f32.gmra.mxu0 %v48
    %v245 = vpop.f32.mrf.mxu0
    %v246 = vadd.f32 %v119, %v245
    %v247 = vpop.f32.mrf.mxu0
    %248 = vmatprep.mubr.f32.mxu0 0.0
    %249 = vmatmul.mubr.f32.gmra.mxu0 %v49
    %v250 = vpop.f32.mrf.mxu0
    %v251 = vadd.f32 %v120, %v250
    %v252 = vpop.f32.mrf.mxu0
    %253 = vmatprep.mubr.f32.mxu0 0.0
    %254 = vmatmul.mubr.f32.gmra.mxu0 %v50
    %v255 = vpop.f32.mrf.mxu0
    %v256 = vadd.f32 %v121, %v255
    %v257 = vpop.f32.mrf.mxu0
    %258 = vmatprep.mubr.f32.mxu0 0.0
    %259 = vmatmul.mubr.f32.gmra.mxu0 %v51
    %v260 = vpop.f32.mrf.mxu0
    %v261 = vadd.f32 %v122, %v260
    %v262 = vpop.f32.mrf.mxu0
    %263 = vmatprep.mubr.f32.mxu0 0.0
    %264 = vmatmul.mubr.f32.gmra.mxu0 %v52
    %v265 = vpop.f32.mrf.mxu0
    %v266 = vadd.f32 %v123, %v265
    %v267 = vpop.f32.mrf.mxu0
    %268 = vdwg.mxu0
    %v269 = vmul.f32 %v108, %v191
    %v270 = vmul.f32 %v109, %v196
    %v271 = vmul.f32 %v110, %v201
    %v272 = vmul.f32 %v111, %v206
    %v273 = vmul.f32 %v112, %v211
    %v274 = vmul.f32 %v113, %v216
    %v275 = vmul.f32 %v114, %v221
    %v276 = vmul.f32 %v115, %v226
    %v277 = vmul.f32 %v116, %v231
    %v278 = vmul.f32 %v117, %v236
    %v279 = vmul.f32 %v118, %v241
    %v280 = vmul.f32 %v119, %v246
    %v281 = vmul.f32 %v120, %v251
    %v282 = vmul.f32 %v121, %v256
    %v283 = vmul.f32 %v122, %v261
    %v284 = vmul.f32 %v123, %v266
    %286 = vset.pattern.permute.xlu0 0
    %287 = vperm.xlu0 %286, %v108
    %v288 = vpop.permute.xlu0 %287
    %291 = vset.pattern.permute.xlu0 0
    %292 = vperm.xlu0 %291, %v109
    %v293 = vpop.permute.xlu0 %292
    %296 = vset.pattern.permute.xlu0 0
    %297 = vperm.xlu0 %296, %v110
    %v298 = vpop.permute.xlu0 %297
    %301 = vset.pattern.permute.xlu0 0
    %302 = vperm.xlu0 %301, %v111
    %v303 = vpop.permute.xlu0 %302
    %306 = vset.pattern.permute.xlu0 0
    %307 = vperm.xlu0 %306, %v112
    %v308 = vpop.permute.xlu0 %307
    %311 = vset.pattern.permute.xlu0 0
    %312 = vperm.xlu0 %311, %v113
    %v313 = vpop.permute.xlu0 %312
    %316 = vset.pattern.permute.xlu0 0
    %317 = vperm.xlu0 %316, %v114
    %v318 = vpop.permute.xlu0 %317
    %321 = vset.pattern.permute.xlu0 0
    %322 = vperm.xlu0 %321, %v115
    %v323 = vpop.permute.xlu0 %322
    %326 = vset.pattern.permute.xlu0 0
    %327 = vperm.xlu0 %326, %v116
    %v328 = vpop.permute.xlu0 %327
    %331 = vset.pattern.permute.xlu0 0
    %332 = vperm.xlu0 %331, %v117
    %v333 = vpop.permute.xlu0 %332
    %336 = vset.pattern.permute.xlu0 0
    %337 = vperm.xlu0 %336, %v118
    %v338 = vpop.permute.xlu0 %337
    %341 = vset.pattern.permute.xlu0 0
    %342 = vperm.xlu0 %341, %v119
    %v343 = vpop.permute.xlu0 %342
    %346 = vset.pattern.permute.xlu0 0
    %347 = vperm.xlu0 %346, %v120
    %v348 = vpop.permute.xlu0 %347
    %351 = vset.pattern.permute.xlu0 0
    %352 = vperm.xlu0 %351, %v121
    %v353 = vpop.permute.xlu0 %352
    %356 = vset.pattern.permute.xlu0 0
    %357 = vperm.xlu0 %356, %v122
    %v358 = vpop.permute.xlu0 %357
    %361 = vset.pattern.permute.xlu0 0
    %362 = vperm.xlu0 %361, %v123
    %v363 = vpop.permute.xlu0 %362
    %v365 = vmul.f32 %v53, %v288
    %v366 = vmul.f32 %v54, %v293
    %v367 = vmul.f32 %v55, %v298
    %v368 = vmul.f32 %v56, %v303
    %v369 = vmul.f32 %v57, %v308
    %v370 = vmul.f32 %v58, %v313
    %v371 = vmul.f32 %v59, %v318
    %v372 = vmul.f32 %v60, %v323
    %v373 = vmul.f32 %v61, %v328
    %v374 = vmul.f32 %v62, %v333
    %v375 = vmul.f32 %v63, %v338
    %v376 = vmul.f32 %v64, %v343
    %v377 = vmul.f32 %v65, %v348
    %v378 = vmul.f32 %v66, %v353
    %v379 = vmul.f32 %v67, %v358
    %v380 = vmul.f32 %v68, %v363
    %381 = vmatprep.subr.mxu0 0.0
    %382 = vmatpush1.msra.mxu0 %v380
    %383 = vmatprep.subr.mxu0 0.0
    %384 = vmatpush1.msra.mxu0 %v379
    %385 = vmatprep.subr.mxu0 0.0
    %386 = vmatpush1.msra.mxu0 %v378
    %387 = vmatprep.subr.mxu0 0.0
    %388 = vmatpush1.msra.mxu0 %v377
    %389 = vmatprep.subr.mxu0 0.0
    %390 = vmatpush1.msra.mxu0 %v376
    %391 = vmatprep.subr.mxu0 0.0
    %392 = vmatpush1.msra.mxu0 %v375
    %393 = vmatprep.subr.mxu0 0.0
    %394 = vmatpush1.msra.mxu0 %v374
    %395 = vmatprep.subr.mxu0 0.0
    %396 = vmatpush1.msra.mxu0 %v373
    %397 = vmatprep.subr.mxu0 0.0
    %398 = vmatpush1.msra.mxu0 %v372
    %399 = vmatprep.subr.mxu0 0.0
    %400 = vmatpush1.msra.mxu0 %v371
    %401 = vmatprep.subr.mxu0 0.0
    %402 = vmatpush1.msra.mxu0 %v370
    %403 = vmatprep.subr.mxu0 0.0
    %404 = vmatpush1.msra.mxu0 %v369
    %405 = vmatprep.subr.mxu0 0.0
    %406 = vmatpush1.msra.mxu0 %v368
    %407 = vmatprep.subr.mxu0 0.0
    %408 = vmatpush1.msra.mxu0 %v367
    %409 = vmatprep.subr.mxu0 0.0
    %410 = vmatpush1.msra.mxu0 %v366
    %411 = vmatprep.subr.mxu0 0.0
    %412 = vmatpush1.msra.mxu0 %v365
    %413 = vmatprep.subr.mxu0 0.0
    %414 = vmatpush2.msra.mxu0 0.0
    %415 = vmatprep.subr.mxu0 0.0
    %416 = vmatpush2.msra.mxu0 0.0
    %417 = vmatprep.subr.mxu0 0.0
    %418 = vmatpush2.msra.mxu0 0.0
    %419 = vmatprep.subr.mxu0 0.0
    %420 = vmatpush2.msra.mxu0 0.0
    %421 = vmatprep.subr.mxu0 0.0
    %422 = vmatpush2.msra.mxu0 0.0
    %423 = vmatprep.subr.mxu0 0.0
    %424 = vmatpush2.msra.mxu0 0.0
    %425 = vmatprep.subr.mxu0 0.0
    %426 = vmatpush2.msra.mxu0 0.0
    %427 = vmatprep.subr.mxu0 0.0
    %428 = vmatpush2.msra.mxu0 0.0
    %429 = vmatprep.subr.mxu0 0.0
    %430 = vmatpush2.msra.mxu0 0.0
    %431 = vmatprep.subr.mxu0 0.0
    %432 = vmatpush2.msra.mxu0 0.0
    %433 = vmatprep.subr.mxu0 0.0
    %434 = vmatpush2.msra.mxu0 0.0
    %435 = vmatprep.subr.mxu0 0.0
    %436 = vmatpush2.msra.mxu0 0.0
    %437 = vmatprep.subr.mxu0 0.0
    %438 = vmatpush2.msra.mxu0 0.0
    %439 = vmatprep.subr.mxu0 0.0
    %440 = vmatpush2.msra.mxu0 0.0
    %441 = vmatprep.subr.mxu0 0.0
    %442 = vmatpush2.msra.mxu0 0.0
    %443 = vmatprep.subr.mxu0 0.0
    %444 = vmatpush2.msra.mxu0 0.0
    %445 = vmatprep.mubr.f32.mxu0 0.0
    %446 = vmatmul.mubr.f32.gmra.mxu0 %v37
    %v447 = vpop.f32.mrf.mxu0
    %v448 = vadd.f32 %v365, %v447
    %v449 = vpop.f32.mrf.mxu0
    %450 = vmatprep.mubr.f32.mxu0 0.0
    %451 = vmatmul.mubr.f32.gmra.mxu0 %v38
    %v452 = vpop.f32.mrf.mxu0
    %v453 = vadd.f32 %v366, %v452
    %v454 = vpop.f32.mrf.mxu0
    %455 = vmatprep.mubr.f32.mxu0 0.0
    %456 = vmatmul.mubr.f32.gmra.mxu0 %v39
    %v457 = vpop.f32.mrf.mxu0
    %v458 = vadd.f32 %v367, %v457
    %v459 = vpop.f32.mrf.mxu0
    %460 = vmatprep.mubr.f32.mxu0 0.0
    %461 = vmatmul.mubr.f32.gmra.mxu0 %v40
    %v462 = vpop.f32.mrf.mxu0
    %v463 = vadd.f32 %v368, %v462
    %v464 = vpop.f32.mrf.mxu0
    %465 = vmatprep.mubr.f32.mxu0 0.0
    %466 = vmatmul.mubr.f32.gmra.mxu0 %v41
    %v467 = vpop.f32.mrf.mxu0
    %v468 = vadd.f32 %v369, %v467
    %v469 = vpop.f32.mrf.mxu0
    %470 = vmatprep.mubr.f32.mxu0 0.0
    %471 = vmatmul.mubr.f32.gmra.mxu0 %v42
    %v472 = vpop.f32.mrf.mxu0
    %v473 = vadd.f32 %v370, %v472
    %v474 = vpop.f32.mrf.mxu0
    %475 = vmatprep.mubr.f32.mxu0 0.0
    %476 = vmatmul.mubr.f32.gmra.mxu0 %v43
    %v477 = vpop.f32.mrf.mxu0
    %v478 = vadd.f32 %v371, %v477
    %v479 = vpop.f32.mrf.mxu0
    %480 = vmatprep.mubr.f32.mxu0 0.0
    %481 = vmatmul.mubr.f32.gmra.mxu0 %v44
    %v482 = vpop.f32.mrf.mxu0
    %v483 = vadd.f32 %v372, %v482
    %v484 = vpop.f32.mrf.mxu0
    %485 = vmatprep.mubr.f32.mxu0 0.0
    %486 = vmatmul.mubr.f32.gmra.mxu0 %v45
    %v487 = vpop.f32.mrf.mxu0
    %v488 = vadd.f32 %v373, %v487
    %v489 = vpop.f32.mrf.mxu0
    %490 = vmatprep.mubr.f32.mxu0 0.0
    %491 = vmatmul.mubr.f32.gmra.mxu0 %v46
    %v492 = vpop.f32.mrf.mxu0
    %v493 = vadd.f32 %v374, %v492
    %v494 = vpop.f32.mrf.mxu0
    %495 = vmatprep.mubr.f32.mxu0 0.0
    %496 = vmatmul.mubr.f32.gmra.mxu0 %v47
    %v497 = vpop.f32.mrf.mxu0
    %v498 = vadd.f32 %v375, %v497
    %v499 = vpop.f32.mrf.mxu0
    %500 = vmatprep.mubr.f32.mxu0 0.0
    %501 = vmatmul.mubr.f32.gmra.mxu0 %v48
    %v502 = vpop.f32.mrf.mxu0
    %v503 = vadd.f32 %v376, %v502
    %v504 = vpop.f32.mrf.mxu0
    %505 = vmatprep.mubr.f32.mxu0 0.0
    %506 = vmatmul.mubr.f32.gmra.mxu0 %v49
    %v507 = vpop.f32.mrf.mxu0
    %v508 = vadd.f32 %v377, %v507
    %v509 = vpop.f32.mrf.mxu0
    %510 = vmatprep.mubr.f32.mxu0 0.0
    %511 = vmatmul.mubr.f32.gmra.mxu0 %v50
    %v512 = vpop.f32.mrf.mxu0
    %v513 = vadd.f32 %v378, %v512
    %v514 = vpop.f32.mrf.mxu0
    %515 = vmatprep.mubr.f32.mxu0 0.0
    %516 = vmatmul.mubr.f32.gmra.mxu0 %v51
    %v517 = vpop.f32.mrf.mxu0
    %v518 = vadd.f32 %v379, %v517
    %v519 = vpop.f32.mrf.mxu0
    %520 = vmatprep.mubr.f32.mxu0 0.0
    %521 = vmatmul.mubr.f32.gmra.mxu0 %v52
    %v522 = vpop.f32.mrf.mxu0
    %v523 = vadd.f32 %v380, %v522
    %v524 = vpop.f32.mrf.mxu0
    %525 = vdwg.mxu0
    %v526 = vmul.f32 %v288, %v448
    %v527 = vmul.f32 %v293, %v453
    %v528 = vmul.f32 %v298, %v458
    %v529 = vmul.f32 %v303, %v463
    %v530 = vmul.f32 %v308, %v468
    %v531 = vmul.f32 %v313, %v473
    %v532 = vmul.f32 %v318, %v478
    %v533 = vmul.f32 %v323, %v483
    %v534 = vmul.f32 %v328, %v488
    %v535 = vmul.f32 %v333, %v493
    %v536 = vmul.f32 %v338, %v498
    %v537 = vmul.f32 %v343, %v503
    %v538 = vmul.f32 %v348, %v508
    %v539 = vmul.f32 %v353, %v513
    %v540 = vmul.f32 %v358, %v518
    %v541 = vmul.f32 %v363, %v523
    %v542 = vld [vmem:[%s2] sm:$0xff]
    %v543 = vld [vmem:[%s2 + $0x8] sm:$0xff]
    %v544 = vld [vmem:[%s2 + $0x10] sm:$0xff]
    %v545 = vld [vmem:[%s2 + $0x18] sm:$0xff]
    %v546 = vld [vmem:[%s3] sm:$0x1]
    %548 = vset.pattern.permute.xlu0 0
    %549 = vperm.xlu0 %548, %v269
    %v550 = vpop.permute.xlu0 %549
    %553 = vset.pattern.permute.xlu0 0
    %554 = vperm.xlu0 %553, %v270
    %v555 = vpop.permute.xlu0 %554
    %558 = vset.pattern.permute.xlu0 0
    %559 = vperm.xlu0 %558, %v271
    %v560 = vpop.permute.xlu0 %559
    %563 = vset.pattern.permute.xlu0 0
    %564 = vperm.xlu0 %563, %v272
    %v565 = vpop.permute.xlu0 %564
    %568 = vset.pattern.permute.xlu0 0
    %569 = vperm.xlu0 %568, %v273
    %v570 = vpop.permute.xlu0 %569
    %573 = vset.pattern.permute.xlu0 0
    %574 = vperm.xlu0 %573, %v274
    %v575 = vpop.permute.xlu0 %574
    %578 = vset.pattern.permute.xlu0 0
    %579 = vperm.xlu0 %578, %v275
    %v580 = vpop.permute.xlu0 %579
    %583 = vset.pattern.permute.xlu0 0
    %584 = vperm.xlu0 %583, %v276
    %v585 = vpop.permute.xlu0 %584
    %588 = vset.pattern.permute.xlu0 0
    %589 = vperm.xlu0 %588, %v277
    %v590 = vpop.permute.xlu0 %589
    %593 = vset.pattern.permute.xlu0 0
    %594 = vperm.xlu0 %593, %v278
    %v595 = vpop.permute.xlu0 %594
    %598 = vset.pattern.permute.xlu0 0
    %599 = vperm.xlu0 %598, %v279
    %v600 = vpop.permute.xlu0 %599
    %603 = vset.pattern.permute.xlu0 0
    %604 = vperm.xlu0 %603, %v280
    %v605 = vpop.permute.xlu0 %604
    %608 = vset.pattern.permute.xlu0 0
    %609 = vperm.xlu0 %608, %v281
    %v610 = vpop.permute.xlu0 %609
    %613 = vset.pattern.permute.xlu0 0
    %614 = vperm.xlu0 %613, %v282
    %v615 = vpop.permute.xlu0 %614
    %618 = vset.pattern.permute.xlu0 0
    %619 = vperm.xlu0 %618, %v283
    %v620 = vpop.permute.xlu0 %619
    %623 = vset.pattern.permute.xlu0 0
    %624 = vperm.xlu0 %623, %v284
    %v625 = vpop.permute.xlu0 %624
    %v628 = vlaneseq
    %v629 = vshrl.u32 %v628, 7
    %v630 = vsub.s32 0, %v629
    %v631 = vrot.slane %v546, %v630
    %v633 = vmul.f32 %v550, %v631
    %v634 = vmul.f32 %v555, %v631
    %v635 = vmul.f32 %v560, %v631
    %v636 = vmul.f32 %v565, %v631
    %v637 = vmul.f32 %v570, %v631
    %v638 = vmul.f32 %v575, %v631
    %v639 = vmul.f32 %v580, %v631
    %v640 = vmul.f32 %v585, %v631
    %v641 = vmul.f32 %v590, %v631
    %v642 = vmul.f32 %v595, %v631
    %v643 = vmul.f32 %v600, %v631
    %v644 = vmul.f32 %v605, %v631
    %v645 = vmul.f32 %v610, %v631
    %v646 = vmul.f32 %v615, %v631
    %v647 = vmul.f32 %v620, %v631
    %v648 = vmul.f32 %v625, %v631
    %vm649 = vcmask 261120
    %v651 = vsel %vm649, %v526, 0
    %v654 = vsel %vm649, %v527, 0
    %v657 = vsel %vm649, %v528, 0
    %v660 = vsel %vm649, %v529, 0
    %v663 = vsel %vm649, %v530, 0
    %v666 = vsel %vm649, %v531, 0
    %v669 = vsel %vm649, %v532, 0
    %v672 = vsel %vm649, %v533, 0
    %v675 = vsel %vm649, %v534, 0
    %v678 = vsel %vm649, %v535, 0
    %v681 = vsel %vm649, %v536, 0
    %v684 = vsel %vm649, %v537, 0
    %v687 = vsel %vm649, %v538, 0
    %v690 = vsel %vm649, %v539, 0
    %v693 = vsel %vm649, %v540, 0
    %v696 = vsel %vm649, %v541, 0
    %698 = vmatprep.subr.mxu0 0.0
    %699 = vmatpush1.msra.mxu0 0.0
    %700 = vmatprep.subr.mxu0 0.0
    %701 = vmatpush1.msra.mxu0 0.0
    %702 = vmatprep.subr.mxu0 0.0
    %703 = vmatpush1.msra.mxu0 0.0
    %704 = vmatprep.subr.mxu0 0.0
    %705 = vmatpush1.msra.mxu0 0.0
    %706 = vmatprep.subr.mxu0 0.0
    %707 = vmatpush1.msra.mxu0 0.0
    %708 = vmatprep.subr.mxu0 0.0
    %709 = vmatpush1.msra.mxu0 0.0
    %710 = vmatprep.subr.mxu0 0.0
    %711 = vmatpush1.msra.mxu0 0.0
    %712 = vmatprep.subr.mxu0 0.0
    %713 = vmatpush1.msra.mxu0 0.0
    %714 = vmatprep.subr.mxu0 0.0
    %715 = vmatpush1.msra.mxu0 0.0
    %716 = vmatprep.subr.mxu0 0.0
    %717 = vmatpush1.msra.mxu0 0.0
    %718 = vmatprep.subr.mxu0 0.0
    %719 = vmatpush1.msra.mxu0 0.0
    %720 = vmatprep.subr.mxu0 0.0
    %721 = vmatpush1.msra.mxu0 0.0
    %722 = vmatprep.subr.mxu0 0.0
    %723 = vmatpush1.msra.mxu0 %v545
    %724 = vmatprep.subr.mxu0 0.0
    %725 = vmatpush1.msra.mxu0 %v544
    %726 = vmatprep.subr.mxu0 0.0
    %727 = vmatpush1.msra.mxu0 %v543
    %728 = vmatprep.subr.mxu0 0.0
    %729 = vmatpush1.msra.mxu0 %v542
    %730 = vmatprep.subr.mxu0 0.0
    %731 = vmatpush2.msra.mxu0 0.0
    %732 = vmatprep.subr.mxu0 0.0
    %733 = vmatpush2.msra.mxu0 0.0
    %734 = vmatprep.subr.mxu0 0.0
    %735 = vmatpush2.msra.mxu0 0.0
    %736 = vmatprep.subr.mxu0 0.0
    %737 = vmatpush2.msra.mxu0 0.0
    %738 = vmatprep.subr.mxu0 0.0
    %739 = vmatpush2.msra.mxu0 0.0
    %740 = vmatprep.subr.mxu0 0.0
    %741 = vmatpush2.msra.mxu0 0.0
    %742 = vmatprep.subr.mxu0 0.0
    %743 = vmatpush2.msra.mxu0 0.0
    %744 = vmatprep.subr.mxu0 0.0
    %745 = vmatpush2.msra.mxu0 0.0
    %746 = vmatprep.subr.mxu0 0.0
    %747 = vmatpush2.msra.mxu0 0.0
    %748 = vmatprep.subr.mxu0 0.0
    %749 = vmatpush2.msra.mxu0 0.0
    %750 = vmatprep.subr.mxu0 0.0
    %751 = vmatpush2.msra.mxu0 0.0
    %752 = vmatprep.subr.mxu0 0.0
    %753 = vmatpush2.msra.mxu0 0.0
    %754 = vmatprep.subr.mxu0 0.0
    %755 = vmatpush2.msra.mxu0 0.0
    %756 = vmatprep.subr.mxu0 0.0
    %757 = vmatpush2.msra.mxu0 0.0
    %758 = vmatprep.subr.mxu0 0.0
    %759 = vmatpush2.msra.mxu0 0.0
    %760 = vmatprep.subr.mxu0 0.0
    %761 = vmatpush2.msra.mxu0 0.0
    %762 = vmatprep.mubr.f32.mxu0 0.0
    %763 = vmatmul.mubr.f32.gmra.mxu0 %v651
    %v764 = vpop.f32.mrf.mxu0
    %v765 = vadd.f32 %v633, %v764
    %v766 = vpop.f32.mrf.mxu0
    %767 = vmatprep.mubr.f32.mxu0 0.0
    %768 = vmatmul.mubr.f32.gmra.mxu0 %v654
    %v769 = vpop.f32.mrf.mxu0
    %v770 = vadd.f32 %v634, %v769
    %v771 = vpop.f32.mrf.mxu0
    %772 = vmatprep.mubr.f32.mxu0 0.0
    %773 = vmatmul.mubr.f32.gmra.mxu0 %v657
    %v774 = vpop.f32.mrf.mxu0
    %v775 = vadd.f32 %v635, %v774
    %v776 = vpop.f32.mrf.mxu0
    %777 = vmatprep.mubr.f32.mxu0 0.0
    %778 = vmatmul.mubr.f32.gmra.mxu0 %v660
    %v779 = vpop.f32.mrf.mxu0
    %v780 = vadd.f32 %v636, %v779
    %v781 = vpop.f32.mrf.mxu0
    %782 = vmatprep.mubr.f32.mxu0 0.0
    %783 = vmatmul.mubr.f32.gmra.mxu0 %v663
    %v784 = vpop.f32.mrf.mxu0
    %v785 = vadd.f32 %v637, %v784
    %v786 = vpop.f32.mrf.mxu0
    %787 = vmatprep.mubr.f32.mxu0 0.0
    %788 = vmatmul.mubr.f32.gmra.mxu0 %v666
    %v789 = vpop.f32.mrf.mxu0
    %v790 = vadd.f32 %v638, %v789
    %v791 = vpop.f32.mrf.mxu0
    %792 = vmatprep.mubr.f32.mxu0 0.0
    %793 = vmatmul.mubr.f32.gmra.mxu0 %v669
    %v794 = vpop.f32.mrf.mxu0
    %v795 = vadd.f32 %v639, %v794
    %v796 = vpop.f32.mrf.mxu0
    %797 = vmatprep.mubr.f32.mxu0 0.0
    %798 = vmatmul.mubr.f32.gmra.mxu0 %v672
    %v799 = vpop.f32.mrf.mxu0
    %v800 = vadd.f32 %v640, %v799
    %v801 = vpop.f32.mrf.mxu0
    %802 = vmatprep.mubr.f32.mxu0 0.0
    %803 = vmatmul.mubr.f32.gmra.mxu0 %v675
    %v804 = vpop.f32.mrf.mxu0
    %v805 = vadd.f32 %v641, %v804
    %v806 = vpop.f32.mrf.mxu0
    %807 = vmatprep.mubr.f32.mxu0 0.0
    %808 = vmatmul.mubr.f32.gmra.mxu0 %v678
    %v809 = vpop.f32.mrf.mxu0
    %v810 = vadd.f32 %v642, %v809
    %v811 = vpop.f32.mrf.mxu0
    %812 = vmatprep.mubr.f32.mxu0 0.0
    %813 = vmatmul.mubr.f32.gmra.mxu0 %v681
    %v814 = vpop.f32.mrf.mxu0
    %v815 = vadd.f32 %v643, %v814
    %v816 = vpop.f32.mrf.mxu0
    %817 = vmatprep.mubr.f32.mxu0 0.0
    %818 = vmatmul.mubr.f32.gmra.mxu0 %v684
    %v819 = vpop.f32.mrf.mxu0
    %v820 = vadd.f32 %v644, %v819
    %v821 = vpop.f32.mrf.mxu0
    %822 = vmatprep.mubr.f32.mxu0 0.0
    %823 = vmatmul.mubr.f32.gmra.mxu0 %v687
    %v824 = vpop.f32.mrf.mxu0
    %v825 = vadd.f32 %v645, %v824
    %v826 = vpop.f32.mrf.mxu0
    %827 = vmatprep.mubr.f32.mxu0 0.0
    %828 = vmatmul.mubr.f32.gmra.mxu0 %v690
    %v829 = vpop.f32.mrf.mxu0
    %v830 = vadd.f32 %v646, %v829
    %v831 = vpop.f32.mrf.mxu0
    %832 = vmatprep.mubr.f32.mxu0 0.0
    %833 = vmatmul.mubr.f32.gmra.mxu0 %v693
    %v834 = vpop.f32.mrf.mxu0
    %v835 = vadd.f32 %v647, %v834
    %v836 = vpop.f32.mrf.mxu0
    %837 = vmatprep.mubr.f32.mxu0 0.0
    %838 = vmatmul.mubr.f32.gmra.mxu0 %v696
    %v839 = vpop.f32.mrf.mxu0
    %v840 = vadd.f32 %v648, %v839
    %v841 = vpop.f32.mrf.mxu0
    %842 = vdwg.mxu0
    %v843 = vmax.f32 %v765, 0.0
    %v844 = vmax.f32 %v770, 0.0
    %v845 = vmax.f32 %v775, 0.0
    %v846 = vmax.f32 %v780, 0.0
    %v847 = vmax.f32 %v785, 0.0
    %v848 = vmax.f32 %v790, 0.0
    %v849 = vmax.f32 %v795, 0.0
    %v850 = vmax.f32 %v800, 0.0
    %v851 = vmax.f32 %v805, 0.0
    %v852 = vmax.f32 %v810, 0.0
    %v853 = vmax.f32 %v815, 0.0
    %v854 = vmax.f32 %v820, 0.0
    %v855 = vmax.f32 %v825, 0.0
    %v856 = vmax.f32 %v830, 0.0
    %v857 = vmax.f32 %v835, 0.0
    %v858 = vmax.f32 %v840, 0.0
    %v859 = vmul.f32 %v843, %v288
    %v860 = vmul.f32 %v844, %v293
    %v861 = vmul.f32 %v845, %v298
    %v862 = vmul.f32 %v846, %v303
    %v863 = vmul.f32 %v847, %v308
    %v864 = vmul.f32 %v848, %v313
    %v865 = vmul.f32 %v849, %v318
    %v866 = vmul.f32 %v850, %v323
    %v867 = vmul.f32 %v851, %v328
    %v868 = vmul.f32 %v852, %v333
    %v869 = vmul.f32 %v853, %v338
    %v870 = vmul.f32 %v854, %v343
    %v871 = vmul.f32 %v855, %v348
    %v872 = vmul.f32 %v856, %v353
    %v873 = vmul.f32 %v857, %v358
    %v874 = vmul.f32 %v858, %v363
    %875 = vmatprep.subr.mxu0 0.0
    %876 = vmatpush1.msra.mxu0 %v874
    %877 = vmatprep.subr.mxu0 0.0
    %878 = vmatpush1.msra.mxu0 %v873
    %879 = vmatprep.subr.mxu0 0.0
    %880 = vmatpush1.msra.mxu0 %v872
    %881 = vmatprep.subr.mxu0 0.0
    %882 = vmatpush1.msra.mxu0 %v871
    %883 = vmatprep.subr.mxu0 0.0
    %884 = vmatpush1.msra.mxu0 %v870
    %885 = vmatprep.subr.mxu0 0.0
    %886 = vmatpush1.msra.mxu0 %v869
    %887 = vmatprep.subr.mxu0 0.0
    %888 = vmatpush1.msra.mxu0 %v868
    %889 = vmatprep.subr.mxu0 0.0
    %890 = vmatpush1.msra.mxu0 %v867
    %891 = vmatprep.subr.mxu0 0.0
    %892 = vmatpush1.msra.mxu0 %v866
    %893 = vmatprep.subr.mxu0 0.0
    %894 = vmatpush1.msra.mxu0 %v865
    %895 = vmatprep.subr.mxu0 0.0
    %896 = vmatpush1.msra.mxu0 %v864
    %897 = vmatprep.subr.mxu0 0.0
    %898 = vmatpush1.msra.mxu0 %v863
    %899 = vmatprep.subr.mxu0 0.0
    %900 = vmatpush1.msra.mxu0 %v862
    %901 = vmatprep.subr.mxu0 0.0
    %902 = vmatpush1.msra.mxu0 %v861
    %903 = vmatprep.subr.mxu0 0.0
    %904 = vmatpush1.msra.mxu0 %v860
    %905 = vmatprep.subr.mxu0 0.0
    %906 = vmatpush1.msra.mxu0 %v859
    %907 = vmatprep.subr.mxu0 0.0
    %908 = vmatpush2.msra.mxu0 0.0
    %909 = vmatprep.subr.mxu0 0.0
    %910 = vmatpush2.msra.mxu0 0.0
    %911 = vmatprep.subr.mxu0 0.0
    %912 = vmatpush2.msra.mxu0 0.0
    %913 = vmatprep.subr.mxu0 0.0
    %914 = vmatpush2.msra.mxu0 0.0
    %915 = vmatprep.subr.mxu0 0.0
    %916 = vmatpush2.msra.mxu0 0.0
    %917 = vmatprep.subr.mxu0 0.0
    %918 = vmatpush2.msra.mxu0 0.0
    %919 = vmatprep.subr.mxu0 0.0
    %920 = vmatpush2.msra.mxu0 0.0
    %921 = vmatprep.subr.mxu0 0.0
    %922 = vmatpush2.msra.mxu0 0.0
    %923 = vmatprep.subr.mxu0 0.0
    %924 = vmatpush2.msra.mxu0 0.0
    %925 = vmatprep.subr.mxu0 0.0
    %926 = vmatpush2.msra.mxu0 0.0
    %927 = vmatprep.subr.mxu0 0.0
    %928 = vmatpush2.msra.mxu0 0.0
    %929 = vmatprep.subr.mxu0 0.0
    %930 = vmatpush2.msra.mxu0 0.0
    %931 = vmatprep.subr.mxu0 0.0
    %932 = vmatpush2.msra.mxu0 0.0
    %933 = vmatprep.subr.mxu0 0.0
    %934 = vmatpush2.msra.mxu0 0.0
    %935 = vmatprep.subr.mxu0 0.0
    %936 = vmatpush2.msra.mxu0 0.0
    %937 = vmatprep.subr.mxu0 0.0
    %938 = vmatpush2.msra.mxu0 0.0
    %939 = vmatprep.mubr.f32.mxu0 0.0
    %940 = vmatmul.mubr.f32.gmra.mxu0 %v37
    %v941 = vpop.f32.mrf.mxu0
    %v942 = vadd.f32 %v859, %v941
    %v943 = vpop.f32.mrf.mxu0
    %944 = vmatprep.mubr.f32.mxu0 0.0
    %945 = vmatmul.mubr.f32.gmra.mxu0 %v38
    %v946 = vpop.f32.mrf.mxu0
    %v947 = vadd.f32 %v860, %v946
    %v948 = vpop.f32.mrf.mxu0
    %949 = vmatprep.mubr.f32.mxu0 0.0
    %950 = vmatmul.mubr.f32.gmra.mxu0 %v39
    %v951 = vpop.f32.mrf.mxu0
    %v952 = vadd.f32 %v861, %v951
    %v953 = vpop.f32.mrf.mxu0
    %954 = vmatprep.mubr.f32.mxu0 0.0
    %955 = vmatmul.mubr.f32.gmra.mxu0 %v40
    %v956 = vpop.f32.mrf.mxu0
    %v957 = vadd.f32 %v862, %v956
    %v958 = vpop.f32.mrf.mxu0
    %959 = vmatprep.mubr.f32.mxu0 0.0
    %960 = vmatmul.mubr.f32.gmra.mxu0 %v41
    %v961 = vpop.f32.mrf.mxu0
    %v962 = vadd.f32 %v863, %v961
    %v963 = vpop.f32.mrf.mxu0
    %964 = vmatprep.mubr.f32.mxu0 0.0
    %965 = vmatmul.mubr.f32.gmra.mxu0 %v42
    %v966 = vpop.f32.mrf.mxu0
    %v967 = vadd.f32 %v864, %v966
    %v968 = vpop.f32.mrf.mxu0
    %969 = vmatprep.mubr.f32.mxu0 0.0
    %970 = vmatmul.mubr.f32.gmra.mxu0 %v43
    %v971 = vpop.f32.mrf.mxu0
    %v972 = vadd.f32 %v865, %v971
    %v973 = vpop.f32.mrf.mxu0
    %974 = vmatprep.mubr.f32.mxu0 0.0
    %975 = vmatmul.mubr.f32.gmra.mxu0 %v44
    %v976 = vpop.f32.mrf.mxu0
    %v977 = vadd.f32 %v866, %v976
    %v978 = vpop.f32.mrf.mxu0
    %979 = vmatprep.mubr.f32.mxu0 0.0
    %980 = vmatmul.mubr.f32.gmra.mxu0 %v45
    %v981 = vpop.f32.mrf.mxu0
    %v982 = vadd.f32 %v867, %v981
    %v983 = vpop.f32.mrf.mxu0
    %984 = vmatprep.mubr.f32.mxu0 0.0
    %985 = vmatmul.mubr.f32.gmra.mxu0 %v46
    %v986 = vpop.f32.mrf.mxu0
    %v987 = vadd.f32 %v868, %v986
    %v988 = vpop.f32.mrf.mxu0
    %989 = vmatprep.mubr.f32.mxu0 0.0
    %990 = vmatmul.mubr.f32.gmra.mxu0 %v47
    %v991 = vpop.f32.mrf.mxu0
    %v992 = vadd.f32 %v869, %v991
    %v993 = vpop.f32.mrf.mxu0
    %994 = vmatprep.mubr.f32.mxu0 0.0
    %995 = vmatmul.mubr.f32.gmra.mxu0 %v48
    %v996 = vpop.f32.mrf.mxu0
    %v997 = vadd.f32 %v870, %v996
    %v998 = vpop.f32.mrf.mxu0
    %999 = vmatprep.mubr.f32.mxu0 0.0
    %1000 = vmatmul.mubr.f32.gmra.mxu0 %v49
    %v1001 = vpop.f32.mrf.mxu0
    %v1002 = vadd.f32 %v871, %v1001
    %v1003 = vpop.f32.mrf.mxu0
    %1004 = vmatprep.mubr.f32.mxu0 0.0
    %1005 = vmatmul.mubr.f32.gmra.mxu0 %v50
    %v1006 = vpop.f32.mrf.mxu0
    %v1007 = vadd.f32 %v872, %v1006
    %v1008 = vpop.f32.mrf.mxu0
    %1009 = vmatprep.mubr.f32.mxu0 0.0
    %1010 = vmatmul.mubr.f32.gmra.mxu0 %v51
    %v1011 = vpop.f32.mrf.mxu0
    %v1012 = vadd.f32 %v873, %v1011
    %v1013 = vpop.f32.mrf.mxu0
    %1014 = vmatprep.mubr.f32.mxu0 0.0
    %1015 = vmatmul.mubr.f32.gmra.mxu0 %v52
    %v1016 = vpop.f32.mrf.mxu0
    %v1017 = vadd.f32 %v874, %v1016
    %v1018 = vpop.f32.mrf.mxu0
    %1019 = vdwg.mxu0
    %v1020 = vmul.f32 %v288, %v942
    %v1021 = vmul.f32 %v293, %v947
    %v1022 = vmul.f32 %v298, %v952
    %v1023 = vmul.f32 %v303, %v957
    %v1024 = vmul.f32 %v308, %v962
    %v1025 = vmul.f32 %v313, %v967
    %v1026 = vmul.f32 %v318, %v972
    %v1027 = vmul.f32 %v323, %v977
    %v1028 = vmul.f32 %v328, %v982
    %v1029 = vmul.f32 %v333, %v987
    %v1030 = vmul.f32 %v338, %v992
    %v1031 = vmul.f32 %v343, %v997
    %v1032 = vmul.f32 %v348, %v1002
    %v1033 = vmul.f32 %v353, %v1007
    %v1034 = vmul.f32 %v358, %v1012
    %v1035 = vmul.f32 %v363, %v1017
    %v1036 = vld [vmem:[#allocation2] sm:$0xff]
    %v1037 = vld [vmem:[#allocation2 + $0x8] sm:$0xff]
    %v1038 = vld [vmem:[#allocation2 + $0x10] sm:$0xff]
    %v1039 = vld [vmem:[#allocation2 + $0x18] sm:$0xff]
    %v1040 = vld [vmem:[#allocation2 + $0x20] sm:$0xff]
    %v1041 = vld [vmem:[#allocation2 + $0x28] sm:$0xff]
    %v1042 = vld [vmem:[#allocation2 + $0x30] sm:$0xff]
    %v1043 = vld [vmem:[#allocation2 + $0x38] sm:$0xff]
    %v1044 = vld [vmem:[%s5] sm:$0x1]
    %v1046 = vlaneseq
    %v1047 = vshrl.u32 %v1046, 7
    %v1048 = vsub.s32 0, %v1047
    %v1049 = vrot.slane %v1044, %v1048
    %v1051 = vmul.f32 %v550, %v1049
    %v1052 = vmul.f32 %v555, %v1049
    %v1053 = vmul.f32 %v560, %v1049
    %v1054 = vmul.f32 %v565, %v1049
    %v1055 = vmul.f32 %v570, %v1049
    %v1056 = vmul.f32 %v575, %v1049
    %v1057 = vmul.f32 %v580, %v1049
    %v1058 = vmul.f32 %v585, %v1049
    %v1059 = vmul.f32 %v590, %v1049
    %v1060 = vmul.f32 %v595, %v1049
    %v1061 = vmul.f32 %v600, %v1049
    %v1062 = vmul.f32 %v605, %v1049
    %v1063 = vmul.f32 %v610, %v1049
    %v1064 = vmul.f32 %v615, %v1049
    %v1065 = vmul.f32 %v620, %v1049
    %v1066 = vmul.f32 %v625, %v1049
    %vm1067 = vcmask 523264
    %v1069 = vsel %vm1067, %v1020, 0
    %v1072 = vsel %vm1067, %v1021, 0
    %v1075 = vsel %vm1067, %v1022, 0
    %v1078 = vsel %vm1067, %v1023, 0
    %v1081 = vsel %vm1067, %v1024, 0
    %v1084 = vsel %vm1067, %v1025, 0
    %v1087 = vsel %vm1067, %v1026, 0
    %v1090 = vsel %vm1067, %v1027, 0
    %v1093 = vsel %vm1067, %v1028, 0
    %v1096 = vsel %vm1067, %v1029, 0
    %v1099 = vsel %vm1067, %v1030, 0
    %v1102 = vsel %vm1067, %v1031, 0
    %v1105 = vsel %vm1067, %v1032, 0
    %v1108 = vsel %vm1067, %v1033, 0
    %v1111 = vsel %vm1067, %v1034, 0
    %v1114 = vsel %vm1067, %v1035, 0
    %1116 = vmatprep.subr.mxu0 0.0
    %1117 = vmatpush1.msra.mxu0 0.0
    %1118 = vmatprep.subr.mxu0 0.0
    %1119 = vmatpush1.msra.mxu0 0.0
    %1120 = vmatprep.subr.mxu0 0.0
    %1121 = vmatpush1.msra.mxu0 0.0
    %1122 = vmatprep.subr.mxu0 0.0
    %1123 = vmatpush1.msra.mxu0 0.0
    %1124 = vmatprep.subr.mxu0 0.0
    %1125 = vmatpush1.msra.mxu0 0.0
    %1126 = vmatprep.subr.mxu0 0.0
    %1127 = vmatpush1.msra.mxu0 0.0
    %1128 = vmatprep.subr.mxu0 0.0
    %1129 = vmatpush1.msra.mxu0 0.0
    %1130 = vmatprep.subr.mxu0 0.0
    %1131 = vmatpush1.msra.mxu0 0.0
    %1132 = vmatprep.subr.mxu0 0.0
    %1133 = vmatpush1.msra.mxu0 %v1043
    %1134 = vmatprep.subr.mxu0 0.0
    %1135 = vmatpush1.msra.mxu0 %v1042
    %1136 = vmatprep.subr.mxu0 0.0
    %1137 = vmatpush1.msra.mxu0 %v1041
    %1138 = vmatprep.subr.mxu0 0.0
    %1139 = vmatpush1.msra.mxu0 %v1040
    %1140 = vmatprep.subr.mxu0 0.0
    %1141 = vmatpush1.msra.mxu0 %v1039
    %1142 = vmatprep.subr.mxu0 0.0
    %1143 = vmatpush1.msra.mxu0 %v1038
    %1144 = vmatprep.subr.mxu0 0.0
    %1145 = vmatpush1.msra.mxu0 %v1037
    %1146 = vmatprep.subr.mxu0 0.0
    %1147 = vmatpush1.msra.mxu0 %v1036
    %1148 = vmatprep.subr.mxu0 0.0
    %1149 = vmatpush2.msra.mxu0 0.0
    %1150 = vmatprep.subr.mxu0 0.0
    %1151 = vmatpush2.msra.mxu0 0.0
    %1152 = vmatprep.subr.mxu0 0.0
    %1153 = vmatpush2.msra.mxu0 0.0
    %1154 = vmatprep.subr.mxu0 0.0
    %1155 = vmatpush2.msra.mxu0 0.0
    %1156 = vmatprep.subr.mxu0 0.0
    %1157 = vmatpush2.msra.mxu0 0.0
    %1158 = vmatprep.subr.mxu0 0.0
    %1159 = vmatpush2.msra.mxu0 0.0
    %1160 = vmatprep.subr.mxu0 0.0
    %1161 = vmatpush2.msra.mxu0 0.0
    %1162 = vmatprep.subr.mxu0 0.0
    %1163 = vmatpush2.msra.mxu0 0.0
    %1164 = vmatprep.subr.mxu0 0.0
    %1165 = vmatpush2.msra.mxu0 0.0
    %1166 = vmatprep.subr.mxu0 0.0
    %1167 = vmatpush2.msra.mxu0 0.0
    %1168 = vmatprep.subr.mxu0 0.0
    %1169 = vmatpush2.msra.mxu0 0.0
    %1170 = vmatprep.subr.mxu0 0.0
    %1171 = vmatpush2.msra.mxu0 0.0
    %1172 = vmatprep.subr.mxu0 0.0
    %1173 = vmatpush2.msra.mxu0 0.0
    %1174 = vmatprep.subr.mxu0 0.0
    %1175 = vmatpush2.msra.mxu0 0.0
    %1176 = vmatprep.subr.mxu0 0.0
    %1177 = vmatpush2.msra.mxu0 0.0
    %1178 = vmatprep.subr.mxu0 0.0
    %1179 = vmatpush2.msra.mxu0 0.0
    %1180 = vmatprep.mubr.f32.mxu0 0.0
    %1181 = vmatmul.mubr.f32.gmra.mxu0 %v1069
    %v1182 = vpop.f32.mrf.mxu0
    %v1183 = vadd.f32 %v1051, %v1182
    %v1184 = vpop.f32.mrf.mxu0
    %1185 = vmatprep.mubr.f32.mxu0 0.0
    %1186 = vmatmul.mubr.f32.gmra.mxu0 %v1072
    %v1187 = vpop.f32.mrf.mxu0
    %v1188 = vadd.f32 %v1052, %v1187
    %v1189 = vpop.f32.mrf.mxu0
    %1190 = vmatprep.mubr.f32.mxu0 0.0
    %1191 = vmatmul.mubr.f32.gmra.mxu0 %v1075
    %v1192 = vpop.f32.mrf.mxu0
    %v1193 = vadd.f32 %v1053, %v1192
    %v1194 = vpop.f32.mrf.mxu0
    %1195 = vmatprep.mubr.f32.mxu0 0.0
    %1196 = vmatmul.mubr.f32.gmra.mxu0 %v1078
    %v1197 = vpop.f32.mrf.mxu0
    %v1198 = vadd.f32 %v1054, %v1197
    %v1199 = vpop.f32.mrf.mxu0
    %1200 = vmatprep.mubr.f32.mxu0 0.0
    %1201 = vmatmul.mubr.f32.gmra.mxu0 %v1081
    %v1202 = vpop.f32.mrf.mxu0
    %v1203 = vadd.f32 %v1055, %v1202
    %v1204 = vpop.f32.mrf.mxu0
    %1205 = vmatprep.mubr.f32.mxu0 0.0
    %1206 = vmatmul.mubr.f32.gmra.mxu0 %v1084
    %v1207 = vpop.f32.mrf.mxu0
    %v1208 = vadd.f32 %v1056, %v1207
    %v1209 = vpop.f32.mrf.mxu0
    %1210 = vmatprep.mubr.f32.mxu0 0.0
    %1211 = vmatmul.mubr.f32.gmra.mxu0 %v1087
    %v1212 = vpop.f32.mrf.mxu0
    %v1213 = vadd.f32 %v1057, %v1212
    %v1214 = vpop.f32.mrf.mxu0
    %1215 = vmatprep.mubr.f32.mxu0 0.0
    %1216 = vmatmul.mubr.f32.gmra.mxu0 %v1090
    %v1217 = vpop.f32.mrf.mxu0
    %v1218 = vadd.f32 %v1058, %v1217
    %v1219 = vpop.f32.mrf.mxu0
    %1220 = vmatprep.mubr.f32.mxu0 0.0
    %1221 = vmatmul.mubr.f32.gmra.mxu0 %v1093
    %v1222 = vpop.f32.mrf.mxu0
    %v1223 = vadd.f32 %v1059, %v1222
    %v1224 = vpop.f32.mrf.mxu0
    %1225 = vmatprep.mubr.f32.mxu0 0.0
    %1226 = vmatmul.mubr.f32.gmra.mxu0 %v1096
    %v1227 = vpop.f32.mrf.mxu0
    %v1228 = vadd.f32 %v1060, %v1227
    %v1229 = vpop.f32.mrf.mxu0
    %1230 = vmatprep.mubr.f32.mxu0 0.0
    %1231 = vmatmul.mubr.f32.gmra.mxu0 %v1099
    %v1232 = vpop.f32.mrf.mxu0
    %v1233 = vadd.f32 %v1061, %v1232
    %v1234 = vpop.f32.mrf.mxu0
    %1235 = vmatprep.mubr.f32.mxu0 0.0
    %1236 = vmatmul.mubr.f32.gmra.mxu0 %v1102
    %v1237 = vpop.f32.mrf.mxu0
    %v1238 = vadd.f32 %v1062, %v1237
    %v1239 = vpop.f32.mrf.mxu0
    %1240 = vmatprep.mubr.f32.mxu0 0.0
    %1241 = vmatmul.mubr.f32.gmra.mxu0 %v1105
    %v1242 = vpop.f32.mrf.mxu0
    %v1243 = vadd.f32 %v1063, %v1242
    %v1244 = vpop.f32.mrf.mxu0
    %1245 = vmatprep.mubr.f32.mxu0 0.0
    %1246 = vmatmul.mubr.f32.gmra.mxu0 %v1108
    %v1247 = vpop.f32.mrf.mxu0
    %v1248 = vadd.f32 %v1064, %v1247
    %v1249 = vpop.f32.mrf.mxu0
    %1250 = vmatprep.mubr.f32.mxu0 0.0
    %1251 = vmatmul.mubr.f32.gmra.mxu0 %v1111
    %v1252 = vpop.f32.mrf.mxu0
    %v1253 = vadd.f32 %v1065, %v1252
    %v1254 = vpop.f32.mrf.mxu0
    %1255 = vmatprep.mubr.f32.mxu0 0.0
    %1256 = vmatmul.mubr.f32.gmra.mxu0 %v1114
    %v1257 = vpop.f32.mrf.mxu0
    %v1258 = vadd.f32 %v1066, %v1257
    %v1259 = vpop.f32.mrf.mxu0
    %1260 = vdwg.mxu0
    %1261 = vst [vmem:[%s6] sm:$0xff] %v1183
    %1262 = vst [vmem:[%s6 + $0x8] sm:$0xff] %v1188
    %1263 = vst [vmem:[%s6 + $0x10] sm:$0xff] %v1193
    %1264 = vst [vmem:[%s6 + $0x18] sm:$0xff] %v1198
    %1265 = vst [vmem:[%s6 + $0x20] sm:$0xff] %v1203
    %1266 = vst [vmem:[%s6 + $0x28] sm:$0xff] %v1208
    %1267 = vst [vmem:[%s6 + $0x30] sm:$0xff] %v1213
    %1268 = vst [vmem:[%s6 + $0x38] sm:$0xff] %v1218
    %1269 = vst [vmem:[%s6 + $0x40] sm:$0xff] %v1223
    %1270 = vst [vmem:[%s6 + $0x48] sm:$0xff] %v1228
    %1271 = vst [vmem:[%s6 + $0x50] sm:$0xff] %v1233
    %1272 = vst [vmem:[%s6 + $0x58] sm:$0xff] %v1238
    %1273 = vst [vmem:[%s6 + $0x60] sm:$0xff] %v1243
    %1274 = vst [vmem:[%s6 + $0x68] sm:$0xff] %v1248
    %1275 = vst [vmem:[%s6 + $0x70] sm:$0xff] %v1253
    %1276 = vst [vmem:[%s6 + $0x78] sm:$0xff] %v1258
    // Predicated region
    $region30: #{gcn_forward.1} parent=1 // pred_check
      _
    $region31: #{gcn_forward.1} parent=1 // pred_check_branch
      %1278 = sbr.rel (0) target = $region33
    $region32: #{gcn_forward.1} parent=1 // pred_region
      _
    $region33: #{gcn_forward.1} parent=1 // pred_fallthru
      _
    // Predicated region
    $region34: #{gcn_forward.1} parent=1 // pred_check
      _
    $region35: #{gcn_forward.1} parent=1 // pred_check_branch
      %1280 = sbr.rel (0) target = $region37
    $region36: #{gcn_forward.1} parent=1 // pred_region
      _
    $region37: #{gcn_forward.1} parent=1 // pred_fallthru
      _
    %1281 = vsyncpa [#allocation3], 1

</llo_original>
